<compile_context>
chip_gen: v7x
topology: tpu7x:2x2x1
jax: 0.10.0
libtpu: 0.0.40
codegen_flags: <defaults>
</compile_context>

<pallas_src>
import math

import jax
import jax.numpy as jnp
from jax import lax
from jax.experimental import pallas as pl
from jax.experimental.pallas import tpu as pltpu


_LANE_CHUNK = 128          # in-kernel scan chunk width (one vreg of lanes)
_MAX_TIME_CHUNKS = 32      # time block up to 32*128 = 4096 lanes
_ROW_TILE_MAX = 128        # row (sublane) tile cap: keeps each (tm,128) scan
                           # temp at <=16 vregs -> no spills (v5e single vst slot)
_TIME_STEP_OVERHEAD = 4    # per-grid-step overhead, in equivalent 128-lane chunks
_ROW_STEP_OVERHEAD = 16    # per-grid-step overhead, in equivalent rows


def _round_up(n: int, m: int) -> int:
    return ((n + m - 1) // m) * m


def _cdiv(n: int, m: int) -> int:
    return -(-n // m)


def _choose_row_tile(R: int) -> tuple[int, int]:
    """Pick the row (sublane) tile: multiple of 8, minimal padding + step cost,
    and (when possible) >= 2 row tiles so both v7x TensorCores get work."""
    R8 = _round_up(R, 8)
    tm_cap = _ROW_TILE_MAX
    if R8 >= 16:
        # Guarantee >= 2 row tiles for the "parallel" megacore axis.
        tm_cap = min(tm_cap, max(8, ((R8 // 2) // 8) * 8))
    best = None
    for tm in range(8, min(tm_cap, R8) + 1, 8):
        n_tiles = _cdiv(R, tm)
        cost = n_tiles * (tm + _ROW_STEP_OVERHEAD)   # padded traffic + step overhead
        key = (cost, -tm)
        if best is None or key < best[0]:
            best = (key, tm)
    tm = best[1]
    return tm, _round_up(R, tm)


def _choose_time_tile(T: int) -> tuple[int, int]:
    """Pick the time (lane) tile: c*128 lanes, trading padding against the
    number of grid steps (per-step overhead ~= a few 128-lane chunks)."""
    nT = _cdiv(T, _LANE_CHUNK)
    best = None
    for c in range(1, min(_MAX_TIME_CHUNKS, nT) + 1):
        n_tiles = _cdiv(nT, c)
        cost = n_tiles * (c + _TIME_STEP_OVERHEAD)   # padded traffic + step overhead
        key = (cost, -c)
        if best is None or key < best[0]:
            best = (key, c)
    c = best[1]
    tt = c * _LANE_CHUNK
    return tt, _cdiv(nT, c) * tt


def _integrator_kernel(x_ref, o_ref, carry_ref):
    """y[n] = x[n] + y[n-1] along the last axis (running integral / cumsum).

    The (tm, tt) block is processed as tt/128 sub-chunks.  Each sub-chunk is
    prefix-summed with a log-step lane-rotate scan; the running per-row total
    is carried between sub-chunks (fori_loop carry) and between time tiles
    (VMEM scratch, reset at the first time tile).
    """
    j = pl.program_id(1)

    # Reset the per-row running integral at the start of each row tile.
    # NOTE: correctness relies on the time axis being the LAST grid axis,
    # marked "arbitrary", and reset at j == 0.
    @pl.when(j == 0)
    def _():
        carry_ref[...] = jnp.zeros_like(carry_ref)

    tm, tt = x_ref.shape
    n_chunks = tt // _LANE_CHUNK

    lane = lax.broadcasted_iota(jnp.int32, (tm, _LANE_CHUNK), 1)

    def chunk_body(c, carry):
        t0 = pl.multiple_of(c * _LANE_CHUNK, _LANE_CHUNK)
        x = x_ref[:, pl.ds(t0, _LANE_CHUNK)].astype(jnp.float32)

        # In-chunk inclusive prefix sum: log2(128) = 7 steps of lane-rotate
        # (XLU) + masked add (VPU).  Exact f32 adds (addition order differs
        # from lfilter's sequential recursion only in the last ulps).
        y = x
        shift = 1
        while shift < _LANE_CHUNK:
            rolled = pltpu.roll(y, shift, axis=1)        # rolled[t] = y[t - shift]
            y = y + jnp.where(lane >= shift, rolled, 0.0)  # mask wrapped lanes
            shift *= 2

        y = y + carry                                     # integral of everything before
        o_ref[:, pl.ds(t0, _LANE_CHUNK)] = y.astype(o_ref.dtype)
        # New carry = last lane (already equals old carry + chunk total).
        return y[:, _LANE_CHUNK - 1:_LANE_CHUNK]

    carry = lax.fori_loop(0, n_chunks, chunk_body, carry_ref[...])
    carry_ref[...] = carry


def integrator(x: jax.Array) -> jax.Array:
    """JAX/Pallas equivalent of lfilter(x, a=[1,-1], b=[1,0], clamp=False)."""
    orig_shape = x.shape
    if x.size == 0:
        return x

    T = orig_shape[-1]
    R = math.prod(orig_shape[:-1]) if len(orig_shape) > 1 else 1
    x2d = x.reshape(R, T)

    tm, Rp = _choose_row_tile(R)
    tt, Tp = _choose_time_tile(T)

    if (Rp, Tp) != (R, T):
        # Zero padding is safe: the op is causal in time (trailing zeros never
        # affect earlier outputs) and padded rows are independent.
        x2d = jnp.pad(x2d, ((0, Rp - R), (0, Tp - T)))

    grid = (Rp // tm, Tp // tt)
    itemsize = jnp.dtype(x.dtype).itemsize

    y2d = pl.pallas_call(
        _integrator_kernel,
        out_shape=jax.ShapeDtypeStruct((Rp, Tp), x.dtype),
        grid=grid,
        in_specs=[pl.BlockSpec((tm, tt), lambda i, j: (i, j))],
        out_specs=pl.BlockSpec((tm, tt), lambda i, j: (i, j)),
        scratch_shapes=[pltpu.VMEM((tm, 1), jnp.float32)],
        compiler_params=pltpu.CompilerParams(
            # rows independent -> parallel (both v7x TCs); time carries state.
            dimension_semantics=("parallel", "arbitrary"),
            # Blocks are budgeted to <= ~8 MiB double-buffered, so 32 MiB is
            # ample headroom on every generation (v7x scoped default = 32 MiB).
            vmem_limit_bytes=32 * 1024 * 1024,
        ),
        cost_estimate=pl.CostEstimate(
            flops=2 * Rp * Tp * 7,          # 7 masked-add scan steps per lane
            transcendentals=0,
            bytes_accessed=2 * Rp * Tp * itemsize,
        ),
    )(x2d)

    if (Rp, Tp) != (R, T):
        y2d = y2d[:R, :T]
    return y2d.reshape(orig_shape)


if __name__ == "__main__":
    key = jax.random.PRNGKey(0)
    k1, k2, k3 = jax.random.split(key, 3)

    # Audio-style waveform: (batch=2, channels=4, time=384) -> one wide time
    # tile (fast path: no cross-tile carry needed).
    x = jax.random.normal(k1, (2, 4, 384), dtype=jnp.float32)
    y = integrator(x)
    jax.block_until_ready(y)
    y_ref = jnp.cumsum(x, axis=-1)
    assert y.shape == x.shape, y.shape
    assert jnp.allclose(y, y_ref, atol=1e-3, rtol=1e-3), float(
        jnp.max(jnp.abs(y - y_ref)))

    # Unaligned shape exercising the row/time zero-padding path.
    x2 = jax.random.normal(k2, (3, 200), dtype=jnp.float32)
    y2 = integrator(x2)
    jax.block_until_ready(y2)
    y2_ref = jnp.cumsum(x2, axis=-1)
    assert y2.shape == x2.shape
    assert jnp.allclose(y2, y2_ref, atol=1e-3, rtol=1e-3)

    # Longer sequence + multiple row tiles: exercises the cross-time-tile
    # carry (2 time tiles) and the multi-row-tile "parallel" axis (3 tiles).
    x3 = jax.random.normal(k3, (6, 3, 4500), dtype=jnp.float32)
    y3 = integrator(x3)
    jax.block_until_ready(y3)
    y3_ref = jnp.cumsum(x3, axis=-1)
    assert y3.shape == x3.shape
    assert jnp.allclose(y3, y3_ref, atol=5e-3, rtol=2e-3), float(
        jnp.max(jnp.abs(y3 - y3_ref)))

    print("KERNEL_OK")
</pallas_src>

<mosaic_0001>
module attributes {stable_mosaic.version = 11 : i64} {
  func.func @_integrator_kernel(%arg0: i32, %arg1: i32, %arg2: memref<8x384xf32, #tpu.memory_space<vmem>>, %arg3: memref<8x384xf32, #tpu.memory_space<vmem>>, %arg4: memref<8x1xf32, #tpu.memory_space<vmem>>) attributes {dimension_semantics = [#tpu.dimension_semantics<parallel>, #tpu.dimension_semantics<arbitrary>], iteration_bounds = array<i64: 1, 1>, scalar_prefetch = 0 : i64, scratch_operands = 1 : i64, tpu.core_type = #tpu.core_type<tc>, window_params = [{transform_indices = @transform_0, window_bounds = array<i64: 8, 384>}, {transform_indices = @transform_1, window_bounds = array<i64: 8, 384>}]} {
    %c0_i32 = arith.constant 0 : i32
    %0 = arith.cmpi eq, %arg1, %c0_i32 : i32
    %1 = arith.extui %0 : i1 to i32
    %c0_i32_0 = arith.constant 0 : i32
    %2 = arith.cmpi ne, %1, %c0_i32_0 : i32
    scf.if %2 {
      %cst = arith.constant 0.000000e+00 : f32
      %8 = vector.broadcast %cst : f32 to vector<8x1xf32>
      %c0_6 = arith.constant 0 : index
      %c0_7 = arith.constant 0 : index
      %9 = vector.load %arg4[%c0_6, %c0_7] : memref<8x1xf32, #tpu.memory_space<vmem>>, vector<8x1xf32>
      tpu.vector_store %arg4[%c0_6, %c0_7], %8 {strides = array<i32>} : memref<8x1xf32, #tpu.memory_space<vmem>>, vector<8x1xf32>,
    } else {
    }
    %3 = tpu.iota {dimensions = array<i32: 1>} : vector<8x128xi32>
    %c0 = arith.constant 0 : index
    %c0_1 = arith.constant 0 : index
    %4 = vector.load %arg4[%c0, %c0_1] : memref<8x1xf32, #tpu.memory_space<vmem>>, vector<8x1xf32>
    %c0_i32_2 = arith.constant 0 : i32
    %c3_i32 = arith.constant 3 : i32
    %5 = arith.addi %c0_i32_2, %c3_i32 : i32
    %c1_i32 = arith.constant 1 : i32
    %6 = scf.for %arg5 = %c0_i32_2 to %5 step %c1_i32 iter_args(%arg6 = %4) -> (vector<8x1xf32>)  : i32 {
      %c128_i32 = arith.constant 128 : i32
      %8 = arith.muli %arg5, %c128_i32 : i32
      %9 = tpu.assume_multiple %8, 128 : i32
      %c0_6 = arith.constant 0 : index
      %10 = arith.index_cast %9 : i32 to index
      %11 = vector.load %arg2[%c0_6, %10] : memref<8x384xf32, #tpu.memory_space<vmem>>, vector<8x128xf32>
      %c1_i32_7 = arith.constant 1 : i32
      %12 = tpu.dynamic_rotate %11 by %c1_i32_7 dim 1 : vector<8x128xf32>, i32 -> vector<8x128xf32>
      %c1_i32_8 = arith.constant 1 : i32
      %13 = vector.broadcast %c1_i32_8 : i32 to vector<8x128xi32>
      %14 = arith.cmpi sge, %3, %13 : vector<8x128xi32>
      %cst = arith.constant 0.000000e+00 : f32
      %15 = vector.broadcast %cst : f32 to vector<8x128xf32>
      %16 = arith.select %14, %12, %15 : vector<8x128xi1>, vector<8x128xf32>
      %17 = arith.addf %11, %16 : vector<8x128xf32>
      %c2_i32 = arith.constant 2 : i32
      %18 = tpu.dynamic_rotate %17 by %c2_i32 dim 1 : vector<8x128xf32>, i32 -> vector<8x128xf32>
      %c2_i32_9 = arith.constant 2 : i32
      %19 = vector.broadcast %c2_i32_9 : i32 to vector<8x128xi32>
      %20 = arith.cmpi sge, %3, %19 : vector<8x128xi32>
      %cst_10 = arith.constant 0.000000e+00 : f32
      %21 = vector.broadcast %cst_10 : f32 to vector<8x128xf32>
      %22 = arith.select %20, %18, %21 : vector<8x128xi1>, vector<8x128xf32>
      %23 = arith.addf %17, %22 : vector<8x128xf32>
      %c4_i32 = arith.constant 4 : i32
      %24 = tpu.dynamic_rotate %23 by %c4_i32 dim 1 : vector<8x128xf32>, i32 -> vector<8x128xf32>
      %c4_i32_11 = arith.constant 4 : i32
      %25 = vector.broadcast %c4_i32_11 : i32 to vector<8x128xi32>
      %26 = arith.cmpi sge, %3, %25 : vector<8x128xi32>
      %cst_12 = arith.constant 0.000000e+00 : f32
      %27 = vector.broadcast %cst_12 : f32 to vector<8x128xf32>
      %28 = arith.select %26, %24, %27 : vector<8x128xi1>, vector<8x128xf32>
      %29 = arith.addf %23, %28 : vector<8x128xf32>
      %c8_i32 = arith.constant 8 : i32
      %30 = tpu.dynamic_rotate %29 by %c8_i32 dim 1 : vector<8x128xf32>, i32 -> vector<8x128xf32>
      %c8_i32_13 = arith.constant 8 : i32
      %31 = vector.broadcast %c8_i32_13 : i32 to vector<8x128xi32>
      %32 = arith.cmpi sge, %3, %31 : vector<8x128xi32>
      %cst_14 = arith.constant 0.000000e+00 : f32
      %33 = vector.broadcast %cst_14 : f32 to vector<8x128xf32>
      %34 = arith.select %32, %30, %33 : vector<8x128xi1>, vector<8x128xf32>
      %35 = arith.addf %29, %34 : vector<8x128xf32>
      %c16_i32 = arith.constant 16 : i32
      %36 = tpu.dynamic_rotate %35 by %c16_i32 dim 1 : vector<8x128xf32>, i32 -> vector<8x128xf32>
      %c16_i32_15 = arith.constant 16 : i32
      %37 = vector.broadcast %c16_i32_15 : i32 to vector<8x128xi32>
      %38 = arith.cmpi sge, %3, %37 : vector<8x128xi32>
      %cst_16 = arith.constant 0.000000e+00 : f32
      %39 = vector.broadcast %cst_16 : f32 to vector<8x128xf32>
      %40 = arith.select %38, %36, %39 : vector<8x128xi1>, vector<8x128xf32>
      %41 = arith.addf %35, %40 : vector<8x128xf32>
      %c32_i32 = arith.constant 32 : i32
      %42 = tpu.dynamic_rotate %41 by %c32_i32 dim 1 : vector<8x128xf32>, i32 -> vector<8x128xf32>
      %c32_i32_17 = arith.constant 32 : i32
      %43 = vector.broadcast %c32_i32_17 : i32 to vector<8x128xi32>
      %44 = arith.cmpi sge, %3, %43 : vector<8x128xi32>
      %cst_18 = arith.constant 0.000000e+00 : f32
      %45 = vector.broadcast %cst_18 : f32 to vector<8x128xf32>
      %46 = arith.select %44, %42, %45 : vector<8x128xi1>, vector<8x128xf32>
      %47 = arith.addf %41, %46 : vector<8x128xf32>
      %c64_i32 = arith.constant 64 : i32
      %48 = tpu.dynamic_rotate %47 by %c64_i32 dim 1 : vector<8x128xf32>, i32 -> vector<8x128xf32>
      %c64_i32_19 = arith.constant 64 : i32
      %49 = vector.broadcast %c64_i32_19 : i32 to vector<8x128xi32>
      %50 = arith.cmpi sge, %3, %49 : vector<8x128xi32>
      %cst_20 = arith.constant 0.000000e+00 : f32
      %51 = vector.broadcast %cst_20 : f32 to vector<8x128xf32>
      %52 = arith.select %50, %48, %51 : vector<8x128xi1>, vector<8x128xf32>
      %53 = arith.addf %47, %52 : vector<8x128xf32>
      %54 = vector.broadcast %arg6 : vector<8x1xf32> to vector<8x128xf32>
      %55 = arith.addf %53, %54 : vector<8x128xf32>
      %c0_21 = arith.constant 0 : index
      %56 = arith.index_cast %9 : i32 to index
      %57 = vector.load %arg3[%c0_21, %56] : memref<8x384xf32, #tpu.memory_space<vmem>>, vector<8x128xf32>
      tpu.vector_store %arg3[%c0_21, %56], %55 {strides = array<i32>} : memref<8x384xf32, #tpu.memory_space<vmem>>, vector<8x128xf32>,
      %58 = vector.extract_strided_slice %55 {offsets = [0, 127], sizes = [8, 1], strides = [1, 1]} : vector<8x128xf32> to vector<8x1xf32>
      scf.yield %58 : vector<8x1xf32>
    }
    %c3_i32_3 = arith.constant 3 : i32
    %c0_4 = arith.constant 0 : index
    %c0_5 = arith.constant 0 : index
    %7 = vector.load %arg4[%c0_4, %c0_5] : memref<8x1xf32, #tpu.memory_space<vmem>>, vector<8x1xf32>
    tpu.vector_store %arg4[%c0_4, %c0_5], %6 {strides = array<i32>} : memref<8x1xf32, #tpu.memory_space<vmem>>, vector<8x1xf32>,
    return
  }
  func.func @transform_0(%arg0: i32, %arg1: i32) -> (i32, i32) {
    %c0_i32 = arith.constant 0 : i32
    return %arg0, %arg1 : i32, i32
  }
  func.func @transform_1(%arg0: i32, %arg1: i32) -> (i32, i32) {
    %c0_i32 = arith.constant 0 : i32
    return %arg0, %arg1 : i32, i32
  }
}

</mosaic_0001>

<llo_original>
// kernel: tpu_custom_call.1
$region0: #{tpu_custom_call.1}
  #allocation0 [shape = 'u32[]', space=smem, size = 0x4, offset = 0x4, fixed_abs, tag = 'smem constant byte address 0x4 - core index']
  #allocation1 [shape = 'u32[144,128]{1,0:T(1,128)}', space=vmem, size = 0x12000, scoped, tag = 'internal scratch']
  #allocation2 [shape = 'f32[8,1]{1,0:T(8,128)}', space=vmem, size = 0x1000, scoped, tag = 'scratch operand']
  %s0 = inlined_call_operand.hbm [shape: f32[8,384], index: 0, kind: input, shape index: {}]
  %s1 = inlined_call_operand.hbm [shape: f32[8,384], index: 1, kind: output, shape index: {}]
  %s2 = sld [smem:[#allocation0]]
  $region29: #{tpu_custom_call.1} parent=0
    _
  %s4 = ssub.s32 1, %s2
  %s5 = scalar_select 0, %s4, %s2
  $region1: #{tpu_custom_call.1} parent=0
    #allocation3 [shape = 'u8[12288]{0}', space=vmem, size = 0x3000, scoped, tag = 'input window, operand 0, single buffered']
    #allocation4 [shape = 's32[1]{0}', space=sflag, size = 0x4, scoped, tag = 'scoped memory for tpu_custom_call.1']
    #allocation5 [shape = 's32[1]{0}', space=sflag, size = 0x4, scoped, tag = 'scoped memory for tpu_custom_call.1']
    #allocation6 [shape = 'u8[12288]{0}', space=vmem, size = 0x3000, scoped, tag = 'output window, operand 0, single buffered']
    %6 = vsyncpa [#allocation4], 0
    %7 = vsyncpa [#allocation5], 0
    // Predicated region
    $region2: #{tpu_custom_call.1} parent=1 // pred_check
      _
    $region3: #{tpu_custom_call.1} parent=1 // pred_check_branch
      %9 = sbr.rel (0) target = $region5
    $region4: #{tpu_custom_call.1} parent=1 // pred_region
      %s11 = ssub.s32 384, 384
      %12 = vsyncadd [#allocation4], %s11
      %s14 = sshll.u32 [#allocation3], 4
      %s15 = int_to_ptr.vmem [resolvable:$true] %s14
      %17 = dma.hbm_to_vmem [thread:$0]  %s0, 384, %s15, [#allocation4]
    $region5: #{tpu_custom_call.1} parent=1 // pred_fallthru
      _
    // Predicated region
    $region6: #{tpu_custom_call.1} parent=1 // pred_check
      _
    $region7: #{tpu_custom_call.1} parent=1 // pred_check_branch
      %19 = sbr.rel (0) target = $region9
    $region8: #{tpu_custom_call.1} parent=1 // pred_region
      %20 = dma.done [#allocation4], 384
    $region9: #{tpu_custom_call.1} parent=1 // pred_fallthru
      _
    %p21 = scmp.eq.s32.totalorder 0, 0
    // Predicated region
    $region10: #{tpu_custom_call.1} parent=1 // pred_check
      %p22 = pneg %p21
    $region11: #{tpu_custom_call.1} parent=1 // pred_check_branch
      %24 = sbr.rel (%p22) target = $region13
    $region12: #{tpu_custom_call.1} parent=1 // pred_region
      %vm25 = vcmask 7168
      %26 = vst.msk [vmem:[#allocation2] sm:$0xff] %vm25, 0.0
    $region13: #{tpu_custom_call.1} parent=1 // pred_fallthru
      _
    %v27 = vlaneseq
    %v28 = vand.u32 %v27, 127
    %v29 = vld [vmem:[#allocation2] sm:$0xff]
    loop: start=0, step=1, limit=3
    $region14: #{tpu_custom_call.1} parent=1 // loop_pre_header
      _
    $region15: #{tpu_custom_call.1} parent=1 // loop_header
      %s31 = sphi 0, %s35
      %p32 = scmp.ge.s32.totalorder %s31, 3
      %v36 = vphi %v29, %v89
    $region16: #{tpu_custom_call.1} parent=1 // loop_header_branch
      %34 = sbr.rel (%p32) target = $region20
    $region17: #{tpu_custom_call.1} parent=1 // loop_body
      %s37 = smul.u32 %s31, 128
      %s38 = sshra.s32 %s37, 7
      %s39 = sand.u32 %s37, 127
      %s40 = smul.addr %s38, 8
      %s41 = scalar_lea.vmem [#allocation3], %s40
      %v42 = vld [vmem:[%s41] sm:$0xff]
      %43 = vrot.lane.b32.xlu0 %v42, 1
      %v44 = vpop.permute.xlu0 %43
      %vm45 = vcmp.ge.s32.totalorder %v28, 1
      %v46 = vsel %vm45, %v44, 0.0
      %v47 = vadd.f32 %v42, %v46
      %48 = vrot.lane.b32.xlu0 %v47, 2
      %v49 = vpop.permute.xlu0 %48
      %vm50 = vcmp.ge.s32.totalorder %v28, 2
      %v51 = vsel %vm50, %v49, 0.0
      %v52 = vadd.f32 %v47, %v51
      %53 = vrot.lane.b32.xlu0 %v52, 4
      %v54 = vpop.permute.xlu0 %53
      %vm55 = vcmp.ge.s32.totalorder %v28, 4
      %v56 = vsel %vm55, %v54, 0.0
      %v57 = vadd.f32 %v52, %v56
      %58 = vrot.lane.b32.xlu0 %v57, 8
      %v59 = vpop.permute.xlu0 %58
      %vm60 = vcmp.ge.s32.totalorder %v28, 8
      %v61 = vsel %vm60, %v59, 0.0
      %v62 = vadd.f32 %v57, %v61
      %63 = vrot.lane.b32.xlu0 %v62, 16
      %v64 = vpop.permute.xlu0 %63
      %vm65 = vcmp.ge.s32.totalorder %v28, 16
      %v66 = vsel %vm65, %v64, 0.0
      %v67 = vadd.f32 %v62, %v66
      %68 = vrot.lane.b32.xlu0 %v67, 32
      %v69 = vpop.permute.xlu0 %68
      %vm70 = vcmp.ge.s32.totalorder %v28, 32
      %v71 = vsel %vm70, %v69, 0.0
      %v72 = vadd.f32 %v67, %v71
      %73 = vrot.lane.b32.xlu0 %v72, 64
      %v74 = vpop.permute.xlu0 %73
      %vm75 = vcmp.ge.s32.totalorder %v28, 64
      %v76 = vsel %vm75, %v74, 0.0
      %v77 = vadd.f32 %v72, %v76
      %79 = vset.pattern.permute.xlu0 0
      %80 = vperm.xlu0 %79, %v36
      %v81 = vpop.permute.xlu0 %80
      %v83 = vadd.f32 %v77, %v81
      %s84 = smul.addr %s38, 8
      %s85 = scalar_lea.vmem [#allocation6], %s84
      %86 = vst [vmem:[%s85] sm:$0xff] %v83
      %88 = vrot.lane.b32.xlu0 %v83, 1
      %v89 = vpop.permute.xlu0 %88
    $region18: #{tpu_custom_call.1} parent=1 // loop_footer
      %s35 = sadd.s32 1, %s31
    $region19: #{tpu_custom_call.1} parent=1 // loop_footer_branch
      %30 = sbr.rel target = $region15
    $region20: #{tpu_custom_call.1} parent=1 // loop_exit
      _
    %vm91 = vcmask 7168
    %92 = vst.msk [vmem:[#allocation2] sm:$0xff] %vm91, %v36
    // Predicated region
    $region21: #{tpu_custom_call.1} parent=1 // pred_check
      _
    $region22: #{tpu_custom_call.1} parent=1 // pred_check_branch
      %94 = sbr.rel (0) target = $region24
    $region23: #{tpu_custom_call.1} parent=1 // pred_region
      %s96 = ssub.s32 384, 384
      %97 = vsyncadd [#allocation5], %s96
      %s99 = sshll.u32 [#allocation6], 4
      %s100 = int_to_ptr.vmem [resolvable:$true] %s99
      %102 = dma.vmem_to_hbm [thread:$0]  %s100, 384, %s1, [#allocation5]
    $region24: #{tpu_custom_call.1} parent=1 // pred_fallthru
      _
    // Predicated region
    $region25: #{tpu_custom_call.1} parent=1 // pred_check
      _
    $region26: #{tpu_custom_call.1} parent=1 // pred_check_branch
      %104 = sbr.rel (0) target = $region28
    $region27: #{tpu_custom_call.1} parent=1 // pred_region
      %105 = dma.done [#allocation5], 384
    $region28: #{tpu_custom_call.1} parent=1 // pred_fallthru
      _
    %106 = vsyncpa [#allocation4], 1
    %107 = vsyncpa [#allocation5], 1

</llo_original>
